<compile_context>
chip_gen: v5e
topology: v5e:2x2
jax: 0.10.0
libtpu: 0.0.40
codegen_flags: <defaults>
</compile_context>

<pallas_src>
import functools

import jax
import jax.numpy as jnp
from jax.experimental import pallas as pl
from jax.experimental.pallas import tpu as pltpu

LANE = 128
SUBLANE = 8


def _round_up(n: int, m: int) -> int:
    return ((n + m - 1) // m) * m


def ann_kernel(x_ref, w1_ref, b1_ref, w2_ref, b2_ref, o_ref):
    # Layer 1: (TB, Dp) @ (Dp, Hp) on the MXU, f32 accumulation.
    h = jnp.dot(x_ref[...], w1_ref[...], preferred_element_type=jnp.float32)
    # Bias add + sigmoid in f32 (VPU + EUP). b1 is (1, Hp) and broadcasts over rows.
    h = jax.nn.sigmoid(h + b1_ref[...])
    # Layer 2: cast activations back to the MXU input dtype, accumulate in f32.
    y = jnp.dot(h.astype(w2_ref.dtype), w2_ref[...], preferred_element_type=jnp.float32)
    o_ref[...] = jax.nn.sigmoid(y + b2_ref[...]).astype(o_ref.dtype)


@functools.partial(jax.jit, static_argnames=("block_b", "mxu_dtype"))
def ann_forward(x, w1, b1, w2, b2, *, block_b=512, mxu_dtype=jnp.bfloat16):
    """x: (B, dim); w1: (dim, hidden); b1: (1, hidden); w2: (hidden, dim); b2: (1, dim)."""
    B, dim = x.shape
    hidden = w1.shape[1]
    out_dtype = x.dtype

    b1 = b1.reshape(1, hidden)
    b2 = b2.reshape(1, dim)

    # Lane-dense feature dims, sublane-aligned batch tile.
    dim_p = _round_up(dim, LANE)
    hid_p = _round_up(hidden, LANE)
    tb = min(block_b, _round_up(B, SUBLANE))
    b_p = _round_up(B, tb)

    # Zero-pad; padded rows/cols of the weights are zero so valid outputs are exact.
    x_p = jnp.pad(x, ((0, b_p - B), (0, dim_p - dim))).astype(mxu_dtype)
    w1_p = jnp.pad(w1, ((0, dim_p - dim), (0, hid_p - hidden))).astype(mxu_dtype)
    w2_p = jnp.pad(w2, ((0, hid_p - hidden), (0, dim_p - dim))).astype(mxu_dtype)
    b1_p = jnp.pad(b1, ((0, 0), (0, hid_p - hidden))).astype(jnp.float32)
    b2_p = jnp.pad(b2, ((0, 0), (0, dim_p - dim))).astype(jnp.float32)

    out = pl.pallas_call(
        ann_kernel,
        out_shape=jax.ShapeDtypeStruct((b_p, dim_p), out_dtype),
        grid=(b_p // tb,),
        in_specs=[
            pl.BlockSpec((tb, dim_p), lambda i: (i, 0)),     # x: streamed over batch
            pl.BlockSpec((dim_p, hid_p), lambda i: (0, 0)),  # W1: VMEM-resident
            pl.BlockSpec((1, hid_p), lambda i: (0, 0)),      # b1: VMEM-resident
            pl.BlockSpec((hid_p, dim_p), lambda i: (0, 0)),  # W2: VMEM-resident
            pl.BlockSpec((1, dim_p), lambda i: (0, 0)),      # b2: VMEM-resident
        ],
        out_specs=pl.BlockSpec((tb, dim_p), lambda i: (i, 0)),
        compiler_params=pltpu.CompilerParams(
            dimension_semantics=("parallel",),
        ),
    )(x_p, w1_p, b1_p, w2_p, b2_p)

    return out[:B, :dim]


def ann_reference(x, w1, b1, w2, b2):
    h = jax.nn.sigmoid(x @ w1 + b1)
    return jax.nn.sigmoid(h @ w2 + b2)


if __name__ == "__main__":
    batch, dim, hidden = 8, 16, 32
    key = jax.random.PRNGKey(0)
    kx, k1, kb1, k2, kb2 = jax.random.split(key, 5)

    x = jax.random.normal(kx, (batch, dim), dtype=jnp.float32)

    # Deterministic init mimicking nn.Linear's U(-1/sqrt(fan_in), 1/sqrt(fan_in)).
    bound1 = 1.0 / (dim ** 0.5)
    w1 = jax.random.uniform(k1, (dim, hidden), jnp.float32, -bound1, bound1)
    b1 = jax.random.uniform(kb1, (1, hidden), jnp.float32, -bound1, bound1)
    bound2 = 1.0 / (hidden ** 0.5)
    w2 = jax.random.uniform(k2, (hidden, dim), jnp.float32, -bound2, bound2)
    b2 = jax.random.uniform(kb2, (1, dim), jnp.float32, -bound2, bound2)

    out = ann_forward(x, w1, b1, w2, b2)
    out = jax.block_until_ready(out)

    assert out.shape == (batch, dim)

    # Loose check vs. the full-f32 reference (kernel feeds the MXU bf16 inputs).
    ref_f32 = ann_reference(x, w1, b1, w2, b2)
    assert jnp.allclose(out, ref_f32, atol=2e-2, rtol=2e-2)

    # Tighter precision-matched check (same bf16 input rounding, f32 accumulation).
    rb = lambda a: a.astype(jnp.bfloat16).astype(jnp.float32)
    h_m = jax.nn.sigmoid(rb(x) @ rb(w1) + b1)
    ref_mixed = jax.nn.sigmoid(rb(h_m) @ rb(w2) + b2)
    assert jnp.allclose(out, ref_mixed, atol=1e-4, rtol=1e-4)

    print("KERNEL_OK")
</pallas_src>

<mosaic_0001>
module attributes {stable_mosaic.version = 11 : i64} {
  func.func @ann_kernel(%arg0: i32, %arg1: memref<8x128xbf16, #tpu.memory_space<vmem>>, %arg2: memref<128x128xbf16, #tpu.memory_space<vmem>>, %arg3: memref<1x128xf32, #tpu.memory_space<vmem>>, %arg4: memref<128x128xbf16, #tpu.memory_space<vmem>>, %arg5: memref<1x128xf32, #tpu.memory_space<vmem>>, %arg6: memref<8x128xf32, #tpu.memory_space<vmem>>) attributes {dimension_semantics = [#tpu.dimension_semantics<parallel>], iteration_bounds = array<i64: 1>, scalar_prefetch = 0 : i64, scratch_operands = 0 : i64, tpu.core_type = #tpu.core_type<tc>, window_params = [{transform_indices = @transform_0, window_bounds = array<i64: 8, 128>}, {pipeline_mode = #tpu.pipeline_mode<synchronous>, transform_indices = @transform_1, window_bounds = array<i64: 128, 128>}, {pipeline_mode = #tpu.pipeline_mode<synchronous>, transform_indices = @transform_2, window_bounds = array<i64: 1, 128>}, {pipeline_mode = #tpu.pipeline_mode<synchronous>, transform_indices = @transform_3, window_bounds = array<i64: 128, 128>}, {pipeline_mode = #tpu.pipeline_mode<synchronous>, transform_indices = @transform_4, window_bounds = array<i64: 1, 128>}, {transform_indices = @transform_5, window_bounds = array<i64: 8, 128>}]} {
    %c0 = arith.constant 0 : index
    %c0_0 = arith.constant 0 : index
    %0 = vector.load %arg1[%c0, %c0_0] : memref<8x128xbf16, #tpu.memory_space<vmem>>, vector<8x128xbf16>
    %c0_1 = arith.constant 0 : index
    %c0_2 = arith.constant 0 : index
    %1 = vector.load %arg2[%c0_1, %c0_2] : memref<128x128xbf16, #tpu.memory_space<vmem>>, vector<128x128xbf16>
    %cst = arith.constant dense<0.000000e+00> : vector<8x128xf32>
    %2 = tpu.matmul %0, %1, %cst {dimension_numbers = #tpu.dot_dimension_numbers<[1], [0], [0], [1], [0, 0, 1, 1], [], []>} : vector<8x128xbf16>, vector<128x128xbf16>, vector<8x128xf32> -> vector<8x128xf32>
    %c0_3 = arith.constant 0 : index
    %c0_4 = arith.constant 0 : index
    %3 = vector.load %arg3[%c0_3, %c0_4] : memref<1x128xf32, #tpu.memory_space<vmem>>, vector<1x128xf32>
    %4 = vector.broadcast %3 : vector<1x128xf32> to vector<8x128xf32>
    %5 = arith.addf %2, %4 : vector<8x128xf32>
    %6 = arith.negf %5 : vector<8x128xf32>
    %7 = math.exp %6 : vector<8x128xf32>
    %cst_5 = arith.constant 1.000000e+00 : f32
    %8 = vector.broadcast %cst_5 : f32 to vector<8x128xf32>
    %9 = arith.addf %8, %7 : vector<8x128xf32>
    %10 = arith.divf %8, %9 : vector<8x128xf32>
    %11 = arith.truncf %10 : vector<8x128xf32> to vector<8x128xbf16>
    %c0_6 = arith.constant 0 : index
    %c0_7 = arith.constant 0 : index
    %12 = vector.load %arg4[%c0_6, %c0_7] : memref<128x128xbf16, #tpu.memory_space<vmem>>, vector<128x128xbf16>
    %cst_8 = arith.constant dense<0.000000e+00> : vector<8x128xf32>
    %13 = tpu.matmul %11, %12, %cst_8 {dimension_numbers = #tpu.dot_dimension_numbers<[1], [0], [0], [1], [0, 0, 1, 1], [], []>} : vector<8x128xbf16>, vector<128x128xbf16>, vector<8x128xf32> -> vector<8x128xf32>
    %c0_9 = arith.constant 0 : index
    %c0_10 = arith.constant 0 : index
    %14 = vector.load %arg5[%c0_9, %c0_10] : memref<1x128xf32, #tpu.memory_space<vmem>>, vector<1x128xf32>
    %15 = vector.broadcast %14 : vector<1x128xf32> to vector<8x128xf32>
    %16 = arith.addf %13, %15 : vector<8x128xf32>
    %17 = arith.negf %16 : vector<8x128xf32>
    %18 = math.exp %17 : vector<8x128xf32>
    %cst_11 = arith.constant 1.000000e+00 : f32
    %19 = vector.broadcast %cst_11 : f32 to vector<8x128xf32>
    %20 = arith.addf %19, %18 : vector<8x128xf32>
    %21 = arith.divf %19, %20 : vector<8x128xf32>
    %c0_12 = arith.constant 0 : index
    %c0_13 = arith.constant 0 : index
    %22 = vector.load %arg6[%c0_12, %c0_13] : memref<8x128xf32, #tpu.memory_space<vmem>>, vector<8x128xf32>
    tpu.vector_store %arg6[%c0_12, %c0_13], %21 {strides = array<i32>} : memref<8x128xf32, #tpu.memory_space<vmem>>, vector<8x128xf32>,
    return
  }
  func.func @transform_0(%arg0: i32) -> (i32, i32) {
    %c0_i32 = arith.constant 0 : i32
    %c0_i32_0 = arith.constant 0 : i32
    return %arg0, %c0_i32 : i32, i32
  }
  func.func @transform_1(%arg0: i32) -> (i32, i32) {
    %c0_i32 = arith.constant 0 : i32
    %c0_i32_0 = arith.constant 0 : i32
    %c0_i32_1 = arith.constant 0 : i32
    return %c0_i32, %c0_i32_0 : i32, i32
  }
  func.func @transform_2(%arg0: i32) -> (i32, i32) {
    %c0_i32 = arith.constant 0 : i32
    %c0_i32_0 = arith.constant 0 : i32
    %c0_i32_1 = arith.constant 0 : i32
    return %c0_i32, %c0_i32_0 : i32, i32
  }
  func.func @transform_3(%arg0: i32) -> (i32, i32) {
    %c0_i32 = arith.constant 0 : i32
    %c0_i32_0 = arith.constant 0 : i32
    %c0_i32_1 = arith.constant 0 : i32
    return %c0_i32, %c0_i32_0 : i32, i32
  }
  func.func @transform_4(%arg0: i32) -> (i32, i32) {
    %c0_i32 = arith.constant 0 : i32
    %c0_i32_0 = arith.constant 0 : i32
    %c0_i32_1 = arith.constant 0 : i32
    return %c0_i32, %c0_i32_0 : i32, i32
  }
  func.func @transform_5(%arg0: i32) -> (i32, i32) {
    %c0_i32 = arith.constant 0 : i32
    %c0_i32_0 = arith.constant 0 : i32
    return %arg0, %c0_i32 : i32, i32
  }
}

</mosaic_0001>

<llo_original>
// kernel: ann_forward.1
$region0: #{ann_forward.1}
  #allocation0 [shape = 'u32[]', space=smem, size = 0x4, offset = 0x4, fixed_abs, tag = 'smem constant byte address 0x4 - core index']
  #allocation1 [shape = 'u32[72,128]{1,0:T(1,128)}', space=vmem, size = 0x9000, scoped, tag = 'internal scratch']
  %s0 = inlined_call_operand.vmem [shape: bf16[8,128], index: 0, kind: input, shape index: {}]
  %s1 = inlined_call_operand.vmem [shape: bf16[128,128], index: 1, kind: input, shape index: {}]
  %s2 = inlined_call_operand.vmem [shape: f32[1,128], index: 2, kind: input, shape index: {}]
  %s3 = inlined_call_operand.vmem [shape: bf16[128,128], index: 3, kind: input, shape index: {}]
  %s4 = inlined_call_operand.vmem [shape: f32[1,128], index: 4, kind: input, shape index: {}]
  %s5 = inlined_call_operand.hbm [shape: f32[8,128], index: 5, kind: output, shape index: {}]
  %s6 = sld [smem:[#allocation0]]
  $region30: #{ann_forward.1} parent=0
    _
  %s8 = ssub.s32 1, %s6
  %s9 = scalar_select 0, %s8, %s6
  $region1: #{ann_forward.1} parent=0
    #allocation2 [shape = 'u8[4096]{0}', space=vmem, size = 0x1000, scoped, tag = 'output window, operand 0, single buffered']
    #allocation3 [shape = 's32[1]{0}', space=sflag, size = 0x4, scoped, tag = 'scoped memory for ann_forward.1']
    %10 = vsyncpa [#allocation3], 0
    // Predicated region
    $region2: #{ann_forward.1} parent=1 // pred_check
      _
    $region3: #{ann_forward.1} parent=1 // pred_check_branch
      %12 = sbr.rel (0) target = $region5
    $region4: #{ann_forward.1} parent=1 // pred_region
      _
    $region5: #{ann_forward.1} parent=1 // pred_fallthru
      _
    // Predicated region
    $region6: #{ann_forward.1} parent=1 // pred_check
      _
    $region7: #{ann_forward.1} parent=1 // pred_check_branch
      %14 = sbr.rel (0) target = $region9
    $region8: #{ann_forward.1} parent=1 // pred_region
      _
    $region9: #{ann_forward.1} parent=1 // pred_fallthru
      _
    // Predicated region
    $region10: #{ann_forward.1} parent=1 // pred_check
      _
    $region11: #{ann_forward.1} parent=1 // pred_check_branch
      %16 = sbr.rel (0) target = $region13
    $region12: #{ann_forward.1} parent=1 // pred_region
      _
    $region13: #{ann_forward.1} parent=1 // pred_fallthru
      _
    // Predicated region
    $region14: #{ann_forward.1} parent=1 // pred_check
      _
    $region15: #{ann_forward.1} parent=1 // pred_check_branch
      %18 = sbr.rel (0) target = $region17
    $region16: #{ann_forward.1} parent=1 // pred_region
      _
    $region17: #{ann_forward.1} parent=1 // pred_fallthru
      _
    // Predicated region
    $region18: #{ann_forward.1} parent=1 // pred_check
      _
    $region19: #{ann_forward.1} parent=1 // pred_check_branch
      %20 = sbr.rel (0) target = $region21
    $region20: #{ann_forward.1} parent=1 // pred_region
      _
    $region21: #{ann_forward.1} parent=1 // pred_fallthru
      _
    %v21 = vld [vmem:[%s0] sm:$0xf]
    %v22 = vld [vmem:[%s1] sm:$0xf]
    %v23 = vld [vmem:[%s1 + $0x4] sm:$0xf]
    %v24 = vld [vmem:[%s1 + $0x8] sm:$0xf]
    %v25 = vld [vmem:[%s1 + $0xc] sm:$0xf]
    %v26 = vld [vmem:[%s1 + $0x10] sm:$0xf]
    %v27 = vld [vmem:[%s1 + $0x14] sm:$0xf]
    %v28 = vld [vmem:[%s1 + $0x18] sm:$0xf]
    %v29 = vld [vmem:[%s1 + $0x1c] sm:$0xf]
    %v30 = vld [vmem:[%s1 + $0x20] sm:$0xf]
    %v31 = vld [vmem:[%s1 + $0x24] sm:$0xf]
    %v32 = vld [vmem:[%s1 + $0x28] sm:$0xf]
    %v33 = vld [vmem:[%s1 + $0x2c] sm:$0xf]
    %v34 = vld [vmem:[%s1 + $0x30] sm:$0xf]
    %v35 = vld [vmem:[%s1 + $0x34] sm:$0xf]
    %v36 = vld [vmem:[%s1 + $0x38] sm:$0xf]
    %v37 = vld [vmem:[%s1 + $0x3c] sm:$0xf]
    %v38 = vld [vmem:[%s2] sm:$0x1]
    %v40 = vperm.slane %v38, 0
    %v58 = vunpack.c.l.b16 %v22
    %v59 = vunpack.c.l.b16 %v23
    %v60 = vunpack.c.l.b16 %v24
    %v61 = vunpack.c.l.b16 %v25
    %v62 = vunpack.c.l.b16 %v26
    %v63 = vunpack.c.l.b16 %v27
    %v64 = vunpack.c.l.b16 %v28
    %v65 = vunpack.c.l.b16 %v29
    %v66 = vunpack.c.l.b16 %v30
    %v67 = vunpack.c.l.b16 %v31
    %v68 = vunpack.c.l.b16 %v32
    %v69 = vunpack.c.l.b16 %v33
    %v70 = vunpack.c.l.b16 %v34
    %v71 = vunpack.c.l.b16 %v35
    %v72 = vunpack.c.l.b16 %v36
    %v73 = vunpack.c.l.b16 %v37
    %v74 = vpack.c.b16 %v59, %v58
    %v75 = vpack.c.b16 %v61, %v60
    %v76 = vpack.c.b16 %v63, %v62
    %v77 = vpack.c.b16 %v65, %v64
    %v78 = vpack.c.b16 %v67, %v66
    %v79 = vpack.c.b16 %v69, %v68
    %v80 = vpack.c.b16 %v71, %v70
    %v81 = vpack.c.b16 %v73, %v72
    %90 = vmatpush.bf16.msra.mxu0 %v81
    %91 = vmatpush.bf16.msra.mxu0 %v80
    %92 = vmatpush.bf16.msra.mxu0 %v79
    %93 = vmatpush.bf16.msra.mxu0 %v78
    %94 = vmatpush.bf16.msra.mxu0 %v77
    %95 = vmatpush.bf16.msra.mxu0 %v76
    %96 = vmatpush.bf16.msra.mxu0 %v75
    %97 = vmatpush.bf16.msra.mxu0 %v74
    %98 = vmatmul.bf16.gmra.mxu0 %v21
    %v99 = vpop.f32.mrf.mxu0
    %v100 = vadd.f32 %v40, %v99
    %v101 = vpop.f32.mrf.mxu0
    %102 = vdwg.mxu0
    %v103 = vxor.u32 %v100, 2147483648
    %v104 = vmul.f32 %v103, 1.442695
    %v105 = vpow.pop %v104
    %v106 = vadd.f32 %v105, 1.0
    %v107 = vrcp.pop %v106
    %v108 = vmul.f32 %v106, %v107
    %v109 = vsub.f32 1.0, %v108
    %v110 = vmul.f32 %v107, %v109
    %v111 = vadd.f32 %v107, %v110
    %vm112 = vweird.f32 %v106
    %vm113 = vweird.f32 %v107
    %vm114 = vmor %vm112, %vm113
    %v115 = vsel %vm114, %v107, %v111
    %v116 = vand.u32 2147483647, %v106
    %vm117 = vcmp.eq.f32.partialorder %v116, 8.507059e+37
    %v118 = vand.u32 %v106, 2147483648
    %v119 = vor.u32 1.1754944e-38, %v118
    %v120 = vsel %vm117, %v119, %v115
    %v121 = vmul.f32 1.0, %v120
    %v122 = vpack.c.bf16 %v121, %v121
    %v123 = vld [vmem:[%s3] sm:$0xf]
    %v124 = vld [vmem:[%s3 + $0x4] sm:$0xf]
    %v125 = vld [vmem:[%s3 + $0x8] sm:$0xf]
    %v126 = vld [vmem:[%s3 + $0xc] sm:$0xf]
    %v127 = vld [vmem:[%s3 + $0x10] sm:$0xf]
    %v128 = vld [vmem:[%s3 + $0x14] sm:$0xf]
    %v129 = vld [vmem:[%s3 + $0x18] sm:$0xf]
    %v130 = vld [vmem:[%s3 + $0x1c] sm:$0xf]
    %v131 = vld [vmem:[%s3 + $0x20] sm:$0xf]
    %v132 = vld [vmem:[%s3 + $0x24] sm:$0xf]
    %v133 = vld [vmem:[%s3 + $0x28] sm:$0xf]
    %v134 = vld [vmem:[%s3 + $0x2c] sm:$0xf]
    %v135 = vld [vmem:[%s3 + $0x30] sm:$0xf]
    %v136 = vld [vmem:[%s3 + $0x34] sm:$0xf]
    %v137 = vld [vmem:[%s3 + $0x38] sm:$0xf]
    %v138 = vld [vmem:[%s3 + $0x3c] sm:$0xf]
    %v139 = vld [vmem:[%s4] sm:$0x1]
    %v141 = vperm.slane %v139, 0
    %v159 = vunpack.c.l.b16 %v123
    %v160 = vunpack.c.l.b16 %v124
    %v161 = vunpack.c.l.b16 %v125
    %v162 = vunpack.c.l.b16 %v126
    %v163 = vunpack.c.l.b16 %v127
    %v164 = vunpack.c.l.b16 %v128
    %v165 = vunpack.c.l.b16 %v129
    %v166 = vunpack.c.l.b16 %v130
    %v167 = vunpack.c.l.b16 %v131
    %v168 = vunpack.c.l.b16 %v132
    %v169 = vunpack.c.l.b16 %v133
    %v170 = vunpack.c.l.b16 %v134
    %v171 = vunpack.c.l.b16 %v135
    %v172 = vunpack.c.l.b16 %v136
    %v173 = vunpack.c.l.b16 %v137
    %v174 = vunpack.c.l.b16 %v138
    %v175 = vpack.c.b16 %v160, %v159
    %v176 = vpack.c.b16 %v162, %v161
    %v177 = vpack.c.b16 %v164, %v163
    %v178 = vpack.c.b16 %v166, %v165
    %v179 = vpack.c.b16 %v168, %v167
    %v180 = vpack.c.b16 %v170, %v169
    %v181 = vpack.c.b16 %v172, %v171
    %v182 = vpack.c.b16 %v174, %v173
    %191 = vmatpush.bf16.msra.mxu0 %v182
    %192 = vmatpush.bf16.msra.mxu0 %v181
    %193 = vmatpush.bf16.msra.mxu0 %v180
    %194 = vmatpush.bf16.msra.mxu0 %v179
    %195 = vmatpush.bf16.msra.mxu0 %v178
    %196 = vmatpush.bf16.msra.mxu0 %v177
    %197 = vmatpush.bf16.msra.mxu0 %v176
    %198 = vmatpush.bf16.msra.mxu0 %v175
    %199 = vmatmul.bf16.gmra.mxu0 %v122
    %v200 = vpop.f32.mrf.mxu0
    %v201 = vadd.f32 %v141, %v200
    %v202 = vpop.f32.mrf.mxu0
    %203 = vdwg.mxu0
    %v204 = vxor.u32 %v201, 2147483648
    %v205 = vmul.f32 %v204, 1.442695
    %v206 = vpow.pop %v205
    %v207 = vadd.f32 %v206, 1.0
    %v208 = vrcp.pop %v207
    %v209 = vmul.f32 %v207, %v208
    %v210 = vsub.f32 1.0, %v209
    %v211 = vmul.f32 %v208, %v210
    %v212 = vadd.f32 %v208, %v211
    %vm213 = vweird.f32 %v207
    %vm214 = vweird.f32 %v208
    %vm215 = vmor %vm213, %vm214
    %v216 = vsel %vm215, %v208, %v212
    %v217 = vand.u32 2147483647, %v207
    %vm218 = vcmp.eq.f32.partialorder %v217, 8.507059e+37
    %v219 = vand.u32 %v207, 2147483648
    %v220 = vor.u32 1.1754944e-38, %v219
    %v221 = vsel %vm218, %v220, %v216
    %v222 = vmul.f32 1.0, %v221
    %223 = vst [vmem:[#allocation2] sm:$0xff] %v222
    // Predicated region
    $region22: #{ann_forward.1} parent=1 // pred_check
      _
    $region23: #{ann_forward.1} parent=1 // pred_check_branch
      %225 = sbr.rel (0) target = $region25
    $region24: #{ann_forward.1} parent=1 // pred_region
      %227 = vsyncadd [#allocation3], 0
      %s229 = sshll.u32 [#allocation2], 4
      %s230 = int_to_ptr.vmem [resolvable:$true] %s229
      %s231 = sshll.u32 %s5, 4
      %s232 = int_to_ptr.hbm [resolvable:$true] %s231
      %234 = dma.vmem_to_hbm [thread:$0]  %s230, 128, %s232, [#allocation3]
    $region25: #{ann_forward.1} parent=1 // pred_fallthru
      _
    // Predicated region
    $region26: #{ann_forward.1} parent=1 // pred_check
      _
    $region27: #{ann_forward.1} parent=1 // pred_check_branch
      %236 = sbr.rel (0) target = $region29
    $region28: #{ann_forward.1} parent=1 // pred_region
      %238 = dma.done [#allocation3], 128
    $region29: #{ann_forward.1} parent=1 // pred_fallthru
      _
    %239 = vsyncpa [#allocation3], 1

</llo_original>
